<compile_context>
chip_gen: v5e
topology: v5e:2x2
jax: 0.10.0
libtpu: 0.0.40
codegen_flags: <defaults>
</compile_context>

<pallas_src>
import jax
import jax.numpy as jnp
from jax import lax
from jax.experimental import pallas as pl
from jax.experimental.pallas import tpu as pltpu


def _round_up(x, m):
    return ((x + m - 1) // m) * m


# ----------------------------- Pallas kernel -------------------------------

def _primary_caps_kernel(p_ref, w_ref, b_ref, s_ref, o_ref, acc_ref):
    # p_ref:   (TM, TK)    bf16  im2col patch rows (batch collapsed into rows)
    # w_ref:   (TK, NDp)   bf16  conv weight, (kh, kw, cin)-major, zero-padded
    # b_ref:   (1, NDp)    f32   conv bias, zero-padded
    # s_ref:   (NDp, NDp)  bf16  same-capsule block mask (1 where same capsule)
    # o_ref:   (TM, NDp)   x.dtype  squashed output, still in conv layout
    # acc_ref: (TM, NDp)   f32   K-reduction accumulator (VMEM scratch)
    k = pl.program_id(1)

    @pl.when(k == 0)
    def _():
        acc_ref[...] = jnp.zeros_like(acc_ref)

    acc_ref[...] += jnp.dot(p_ref[...], w_ref[...],
                            preferred_element_type=jnp.float32)

    @pl.when(k == pl.num_programs(1) - 1)
    def _():
        conv = acc_ref[...] + b_ref[...]                        # [TM, NDp] f32
        # Per-capsule squared norm, broadcast back over that capsule's D
        # columns, via one bf16 MXU pass (f32 accumulation).  Avoids an
        # in-kernel reshape/transpose and a D=8 cross-lane reduce.
        sq = jnp.dot((conv * conv).astype(jnp.bfloat16), s_ref[...],
                     preferred_element_type=jnp.float32)
        # squash: ||s||^2 / (1 + ||s||^2) * s / (||s|| + 1e-8)
        # (padded columns have sq == 0, so scale = 0 * ~1e8 stays finite)
        norm = jnp.sqrt(sq)
        scale = sq * pl.reciprocal((1.0 + sq) * (norm + 1e-8), approx=True)
        o_ref[...] = (conv * scale).astype(o_ref.dtype)


# ------------------------------ tiling helpers -------------------------------

def _choose_row_tile(m):
    # >=2 row-tile grid steps (so v7x's second TensorCore gets work) while
    # keeping the MXU M dimension reasonably full.
    if m >= 1024:
        return 256
    if m >= 256:
        return 128
    if m >= 64:
        return 64
    return max(8, _round_up(m, 8))


def _choose_k_tile(kkc, tm, ndp, budget_bytes=40 << 20):
    # Double-buffered bf16 LHS (tm, tk) + RHS (tk, ndp) stream ~ 4*tk*(tm+ndp).
    tk_fit = budget_bytes // (4 * (tm + ndp))
    tk = max(128, min(2048, (tk_fit // 128) * 128))
    return min(tk, _round_up(kkc, 128))


# ------------------------------ JAX wrapper ---------------------------------

def primary_capsules_forward(x, weight, bias, num_capsules, capsule_dim,
                             kernel_size=3, stride=2, padding=1):
    """x: [B, Cin, H, W]; weight: [N*D, Cin, K, K]; bias: [N*D].
    Returns squashed capsules [B, num_capsules * HW_out, capsule_dim]."""
    B, C_in, H, W = x.shape
    C_out = weight.shape[0]
    K = kernel_size
    assert C_out == num_capsules * capsule_dim

    H_out = (H + 2 * padding - K) // stride + 1
    W_out = (W + 2 * padding - K) // stride + 1
    HW = H_out * W_out

    M = B * HW                               # batch collapsed into matmul rows
    ND = C_out
    KKC = C_in * K * K
    NDp = _round_up(ND, 128)                 # lane-dense output / MXU N dim
    out_isz = jnp.dtype(x.dtype).itemsize

    TM = _choose_row_tile(M)
    Mp = _round_up(M, TM)
    TK = _choose_k_tile(KKC, TM, NDp)
    KKCp = _round_up(KKC, TK)

    # ------------------------ im2col (wrapper-side) --------------------------
    # One NHWC transpose of the (un-inflated) padded input with the bf16 cast
    # fused; (kh, kw, cin)-ordered slices concatenated straight into the final
    # contraction layout, with the lane zero-padding fused into the concat.
    # TODO(synk): build patch rows in-kernel from a halo-tiled VMEM copy of x
    # (memory_space=pl.ANY + manual DMA) to remove the K^2 HBM blowup entirely.
    xp = jnp.pad(x, ((0, 0), (0, 0), (padding, padding), (padding, padding)))
    xt = jnp.transpose(xp, (0, 2, 3, 1)).astype(jnp.bfloat16)    # [B,Hp,Wp,C]
    cols = [
        xt[:, kh:kh + H_out * stride:stride, kw:kw + W_out * stride:stride, :]
        for kh in range(K) for kw in range(K)
    ]
    if KKCp > KKC:
        cols.append(jnp.zeros((B, H_out, W_out, KKCp - KKC), jnp.bfloat16))
    patches = jnp.concatenate(cols, axis=-1).reshape(M, KKCp)
    if Mp > M:
        patches = jnp.pad(patches, ((0, Mp - M), (0, 0)))

    # Weight flattened in the matching (kh, kw, cin) contraction order.
    w_flat = jnp.transpose(weight, (2, 3, 1, 0)).reshape(KKC, ND)
    w_flat = jnp.pad(w_flat.astype(jnp.bfloat16),
                     ((0, KKCp - KKC), (0, NDp - ND)))
    b_flat = jnp.pad(bias.astype(jnp.float32), (0, NDp - ND)).reshape(1, NDp)

    # Same-capsule block mask (block-diagonal ones within each capsule's D
    # columns), stored bf16 so the norm matmul is a single MXU pass.
    col = jnp.arange(NDp)
    same_cap = (col[:, None] // capsule_dim) == (col[None, :] // capsule_dim)
    valid = col < ND
    s_mat = (same_cap & valid[:, None] & valid[None, :]).astype(jnp.bfloat16)

    # VMEM budget: streamed bf16 LHS/RHS (double-buffered) + resident bits.
    vmem_est = (2 * TM * TK * 2 + 2 * TK * NDp * 2            # LHS / RHS stream
                + 2 * 8 * NDp * 4 + 2 * NDp * NDp * 2         # bias / mask
                + 2 * TM * NDp * out_isz + TM * NDp * 4)      # out blocks / acc
    vmem_limit = int(min(60 << 20, max(32 << 20, vmem_est + (8 << 20))))

    grid = (Mp // TM, KKCp // TK)
    out2d = pl.pallas_call(
        _primary_caps_kernel,
        out_shape=jax.ShapeDtypeStruct((Mp, NDp), x.dtype),
        grid_spec=pltpu.PrefetchScalarGridSpec(
            num_scalar_prefetch=0,
            grid=grid,
            in_specs=[
                pl.BlockSpec((TM, TK), lambda i, k: (i, k)),
                pl.BlockSpec((TK, NDp), lambda i, k: (k, 0)),
                pl.BlockSpec((1, NDp), lambda i, k: (0, 0)),
                pl.BlockSpec((NDp, NDp), lambda i, k: (0, 0)),
            ],
            out_specs=pl.BlockSpec((TM, NDp), lambda i, k: (i, 0)),
            scratch_shapes=[pltpu.VMEM((TM, NDp), jnp.float32)],
        ),
        compiler_params=pltpu.CompilerParams(
            dimension_semantics=("parallel", "arbitrary"),
            vmem_limit_bytes=vmem_limit),
    )(patches, w_flat, b_flat, s_mat)

    # Slice off padding and do the PyTorch view/permute/view in the wrapper:
    # conv layout [B*HW, N*D] -> [B, N*HW, D].
    out = out2d[:M, :ND].reshape(B, HW, num_capsules, capsule_dim)
    out = jnp.transpose(out, (0, 2, 1, 3)).reshape(
        B, num_capsules * HW, capsule_dim)
    return out


# --------------------------- pure-JAX reference -----------------------------

def _reference(x, weight, bias, num_capsules, capsule_dim, stride=2, padding=1):
    u = lax.conv_general_dilated(
        x, weight, window_strides=(stride, stride),
        padding=((padding, padding), (padding, padding)),
        dimension_numbers=("NCHW", "OIHW", "NCHW"),
    ) + bias[None, :, None, None]
    B = x.shape[0]
    u = u.reshape(B, num_capsules, capsule_dim, -1)
    u = jnp.transpose(u, (0, 1, 3, 2))
    u = u.reshape(B, -1, capsule_dim)
    sq = jnp.sum(u * u, axis=-1, keepdims=True)
    norm = jnp.sqrt(sq)
    return (sq / (1.0 + sq)) * (u / (norm + 1e-8))


# ---------------------------------- main ------------------------------------

if __name__ == "__main__":
    # Small shapes consistent with the module.
    B, C_in, H, W = 2, 4, 16, 16
    capsule_dim, num_capsules = 8, 4
    kernel_size, stride, padding = 3, 2, 1
    C_out = num_capsules * capsule_dim

    key = jax.random.PRNGKey(0)
    kx, kw, kb = jax.random.split(key, 3)

    x = jax.random.normal(kx, (B, C_in, H, W), dtype=jnp.float32)
    # Deterministic synthetic parameters (Conv2d(in_channels, N*D, 3, stride=2, padding=1)).
    fan_in = C_in * kernel_size * kernel_size
    weight = jax.random.normal(kw, (C_out, C_in, kernel_size, kernel_size),
                               dtype=jnp.float32) * (1.0 / jnp.sqrt(fan_in))
    bias = jax.random.normal(kb, (C_out,), dtype=jnp.float32) * 0.01

    out = primary_capsules_forward(
        x, weight, bias, num_capsules, capsule_dim,
        kernel_size=kernel_size, stride=stride, padding=padding,
    )
    out = jax.block_until_ready(out)

    ref = _reference(x, weight, bias, num_capsules, capsule_dim,
                     stride=stride, padding=padding)
    assert out.shape == ref.shape
    # bf16 matmul inputs + bf16 norm pass + EUP approx reciprocal -> loosened
    # tolerance vs the f32 reference.
    assert jnp.allclose(out, ref, atol=3e-2, rtol=3e-2)

    print("KERNEL_OK")
</pallas_src>

<mosaic_0001>
module attributes {stable_mosaic.version = 11 : i64} {
  func.func @_primary_caps_kernel(%arg0: i32, %arg1: i32, %arg2: memref<64x128xbf16, #tpu.memory_space<vmem>>, %arg3: memref<128x128xbf16, #tpu.memory_space<vmem>>, %arg4: memref<1x128xf32, #tpu.memory_space<vmem>>, %arg5: memref<128x128xbf16, #tpu.memory_space<vmem>>, %arg6: memref<64x128xf32, #tpu.memory_space<vmem>>, %arg7: memref<64x128xf32, #tpu.memory_space<vmem>>) attributes {dimension_semantics = [#tpu.dimension_semantics<parallel>, #tpu.dimension_semantics<arbitrary>], iteration_bounds = array<i64: 2, 1>, scalar_prefetch = 0 : i64, scratch_operands = 1 : i64, tpu.core_type = #tpu.core_type<tc>, window_params = [{transform_indices = @transform_0, window_bounds = array<i64: 64, 128>}, {transform_indices = @transform_1, window_bounds = array<i64: 128, 128>}, {pipeline_mode = #tpu.pipeline_mode<synchronous>, transform_indices = @transform_2, window_bounds = array<i64: 1, 128>}, {pipeline_mode = #tpu.pipeline_mode<synchronous>, transform_indices = @transform_3, window_bounds = array<i64: 128, 128>}, {transform_indices = @transform_4, window_bounds = array<i64: 64, 128>}]} {
    %c0_i32 = arith.constant 0 : i32
    %0 = arith.cmpi eq, %arg1, %c0_i32 : i32
    %1 = arith.extui %0 : i1 to i32
    %c0_i32_0 = arith.constant 0 : i32
    %2 = arith.cmpi ne, %1, %c0_i32_0 : i32
    scf.if %2 {
      %cst_10 = arith.constant 0.000000e+00 : f32
      %12 = vector.broadcast %cst_10 : f32 to vector<64x128xf32>
      %c0_11 = arith.constant 0 : index
      %c0_12 = arith.constant 0 : index
      %13 = vector.load %arg7[%c0_11, %c0_12] : memref<64x128xf32, #tpu.memory_space<vmem>>, vector<64x128xf32>
      tpu.vector_store %arg7[%c0_11, %c0_12], %12 {strides = array<i32>} : memref<64x128xf32, #tpu.memory_space<vmem>>, vector<64x128xf32>,
    } else {
    }
    %c0 = arith.constant 0 : index
    %c0_1 = arith.constant 0 : index
    %3 = vector.load %arg7[%c0, %c0_1] : memref<64x128xf32, #tpu.memory_space<vmem>>, vector<64x128xf32>
    %c0_2 = arith.constant 0 : index
    %c0_3 = arith.constant 0 : index
    %4 = vector.load %arg2[%c0_2, %c0_3] : memref<64x128xbf16, #tpu.memory_space<vmem>>, vector<64x128xbf16>
    %c0_4 = arith.constant 0 : index
    %c0_5 = arith.constant 0 : index
    %5 = vector.load %arg3[%c0_4, %c0_5] : memref<128x128xbf16, #tpu.memory_space<vmem>>, vector<128x128xbf16>
    %cst = arith.constant dense<0.000000e+00> : vector<64x128xf32>
    %6 = tpu.matmul %4, %5, %cst {dimension_numbers = #tpu.dot_dimension_numbers<[1], [0], [0], [1], [0, 0, 1, 1], [], []>} : vector<64x128xbf16>, vector<128x128xbf16>, vector<64x128xf32> -> vector<64x128xf32>
    %7 = arith.addf %3, %6 : vector<64x128xf32>
    %c0_6 = arith.constant 0 : index
    %c0_7 = arith.constant 0 : index
    %8 = vector.load %arg7[%c0_6, %c0_7] : memref<64x128xf32, #tpu.memory_space<vmem>>, vector<64x128xf32>
    tpu.vector_store %arg7[%c0_6, %c0_7], %7 {strides = array<i32>} : memref<64x128xf32, #tpu.memory_space<vmem>>, vector<64x128xf32>,
    %c0_i32_8 = arith.constant 0 : i32
    %9 = arith.cmpi eq, %arg1, %c0_i32_8 : i32
    %10 = arith.extui %9 : i1 to i32
    %c0_i32_9 = arith.constant 0 : i32
    %11 = arith.cmpi ne, %10, %c0_i32_9 : i32
    scf.if %11 {
      %c0_10 = arith.constant 0 : index
      %c0_11 = arith.constant 0 : index
      %12 = vector.load %arg7[%c0_10, %c0_11] : memref<64x128xf32, #tpu.memory_space<vmem>>, vector<64x128xf32>
      %c0_12 = arith.constant 0 : index
      %c0_13 = arith.constant 0 : index
      %13 = vector.load %arg4[%c0_12, %c0_13] : memref<1x128xf32, #tpu.memory_space<vmem>>, vector<1x128xf32>
      %14 = vector.broadcast %13 : vector<1x128xf32> to vector<64x128xf32>
      %15 = arith.addf %12, %14 : vector<64x128xf32>
      %16 = arith.mulf %15, %15 : vector<64x128xf32>
      %17 = arith.truncf %16 : vector<64x128xf32> to vector<64x128xbf16>
      %c0_14 = arith.constant 0 : index
      %c0_15 = arith.constant 0 : index
      %18 = vector.load %arg5[%c0_14, %c0_15] : memref<128x128xbf16, #tpu.memory_space<vmem>>, vector<128x128xbf16>
      %cst_16 = arith.constant dense<0.000000e+00> : vector<64x128xf32>
      %19 = tpu.matmul %17, %18, %cst_16 {dimension_numbers = #tpu.dot_dimension_numbers<[1], [0], [0], [1], [0, 0, 1, 1], [], []>} : vector<64x128xbf16>, vector<128x128xbf16>, vector<64x128xf32> -> vector<64x128xf32>
      %20 = math.sqrt %19 : vector<64x128xf32>
      %cst_17 = arith.constant 1.000000e+00 : f32
      %21 = vector.broadcast %cst_17 : f32 to vector<64x128xf32>
      %22 = arith.addf %21, %19 : vector<64x128xf32>
      %cst_18 = arith.constant 9.99999993E-9 : f32
      %23 = vector.broadcast %cst_18 : f32 to vector<64x128xf32>
      %24 = arith.addf %20, %23 : vector<64x128xf32>
      %25 = arith.mulf %22, %24 : vector<64x128xf32>
      %26 = tpu.reciprocal %25 {approx = true} : vector<64x128xf32> -> vector<64x128xf32>
      %27 = arith.mulf %19, %26 : vector<64x128xf32>
      %28 = arith.mulf %15, %27 : vector<64x128xf32>
      %c0_19 = arith.constant 0 : index
      %c0_20 = arith.constant 0 : index
      %29 = vector.load %arg6[%c0_19, %c0_20] : memref<64x128xf32, #tpu.memory_space<vmem>>, vector<64x128xf32>
      tpu.vector_store %arg6[%c0_19, %c0_20], %28 {strides = array<i32>} : memref<64x128xf32, #tpu.memory_space<vmem>>, vector<64x128xf32>,
    } else {
    }
    return
  }
  func.func @transform_0(%arg0: i32, %arg1: i32) -> (i32, i32) {
    %c0_i32 = arith.constant 0 : i32
    return %arg0, %arg1 : i32, i32
  }
  func.func @transform_1(%arg0: i32, %arg1: i32) -> (i32, i32) {
    %c0_i32 = arith.constant 0 : i32
    %c0_i32_0 = arith.constant 0 : i32
    return %arg1, %c0_i32 : i32, i32
  }
  func.func @transform_2(%arg0: i32, %arg1: i32) -> (i32, i32) {
    %c0_i32 = arith.constant 0 : i32
    %c0_i32_0 = arith.constant 0 : i32
    %c0_i32_1 = arith.constant 0 : i32
    return %c0_i32, %c0_i32_0 : i32, i32
  }
  func.func @transform_3(%arg0: i32, %arg1: i32) -> (i32, i32) {
    %c0_i32 = arith.constant 0 : i32
    %c0_i32_0 = arith.constant 0 : i32
    %c0_i32_1 = arith.constant 0 : i32
    return %c0_i32, %c0_i32_0 : i32, i32
  }
  func.func @transform_4(%arg0: i32, %arg1: i32) -> (i32, i32) {
    %c0_i32 = arith.constant 0 : i32
    %c0_i32_0 = arith.constant 0 : i32
    return %arg0, %c0_i32 : i32, i32
  }
}

</mosaic_0001>

<llo_original>
// kernel: tpu_custom_call.1
$region0: #{tpu_custom_call.1}
  #allocation0 [shape = 'u32[]', space=smem, size = 0x4, offset = 0x4, fixed_abs, tag = 'smem constant byte address 0x4 - core index']
  #allocation1 [shape = 'u32[72,128]{1,0:T(1,128)}', space=vmem, size = 0x9000, scoped, tag = 'internal scratch']
  #allocation2 [shape = 'f32[64,128]{1,0:T(8,128)}', space=vmem, size = 0x8000, scoped, tag = 'scratch operand']
  %s0 = inlined_call_operand.hbm [shape: bf16[128,128], index: 0, kind: input, shape index: {}]
  %s1 = inlined_call_operand.hbm [shape: bf16[128,128], index: 1, kind: input, shape index: {}]
  %s2 = inlined_call_operand.vmem [shape: f32[1,128], index: 2, kind: input, shape index: {}]
  %s3 = inlined_call_operand.hbm [shape: bf16[128,128], index: 3, kind: input, shape index: {}]
  %s4 = inlined_call_operand.hbm [shape: f32[128,128], index: 4, kind: output, shape index: {}]
  %s5 = sld [smem:[#allocation0]]
  $region69: #{tpu_custom_call.1} parent=0
    _
  %s7 = ssub.s32 1, %s5
  %s8 = scalar_select 0, %s7, %s5
  $region1: #{tpu_custom_call.1} parent=0
    #allocation3 [shape = 'u8[32768]{0}', space=vmem, size = 0x8000, scoped, tag = 'input window, operand 0']
    #allocation4 [shape = 's32[2]{0}', space=sflag, size = 0x8, scoped, tag = 'scoped memory for tpu_custom_call.1']
    #allocation5 [shape = 's32[2]{0}', space=sflag, size = 0x8, scoped, tag = 'scoped memory for tpu_custom_call.1']
    #allocation6 [shape = 'u8[32768]{0}', space=vmem, size = 0x8000, scoped, tag = 'input window, operand 1, single buffered']
    #allocation7 [shape = 's32[1]{0}', space=sflag, size = 0x4, scoped, tag = 'scoped memory for tpu_custom_call.1']
    #allocation8 [shape = 'u8[32768]{0}', space=vmem, size = 0x8000, scoped, tag = 'input window, operand 3, single buffered']
    #allocation9 [shape = 'u8[65536]{0}', space=vmem, size = 0x10000, scoped, tag = 'output window, operand 0']
    %9 = vsyncpa [#allocation4], 0
    %s10 = scalar_lea.sflag [#allocation4], 1
    %11 = vsyncpa %s10, 0
    %12 = vsyncpa [#allocation7], 0
    %13 = vsyncpa [#allocation5], 0
    %s14 = scalar_lea.sflag [#allocation5], 1
    %15 = vsyncpa %s14, 0
    loop: start=0, step=1, limit=4
    $region2: #{tpu_custom_call.1} parent=1 // loop_pre_header
      _
    $region3: #{tpu_custom_call.1} parent=1 // loop_header
      %s17 = sphi 0, %s21
      %p18 = scmp.ge.s32.totalorder %s17, 4
      %s24 = sphi 0, %s36
      %s25 = sphi 0, %s32
      %s26 = sphi 0, %s24
      %s27 = sphi 0, %s25
      %s28 = sphi 0, %s26
      %s29 = sphi 0, %s27
      %s41 = sphi 0, %s43
      %s44 = sphi 0, %s41
      %s45 = sphi 0, %s44
      %s61 = sphi 0, %s45
      %s67 = sphi 0, %s69
      %s70 = sphi 0, %s67
      %s71 = sphi 0, %s70
      %s87 = sphi 0, %s71
      %s91 = sphi 0, %s91
      %s93 = sphi 0, %s91
      %s94 = sphi 0, %s93
      %s108 = sphi 0, %s94
      %s112 = sphi 0, %s112
      %s114 = sphi 0, %s112
      %s115 = sphi 0, %s114
      %s129 = sphi 0, %s115
      %s135 = sphi 0, %s137
      %s138 = sphi 0, %s135
      %s139 = sphi 0, %s138
      %s155 = sphi 0, %s139
    $region4: #{tpu_custom_call.1} parent=1 // loop_header_branch
      %20 = sbr.rel (%p18) target = $region8
    $region5: #{tpu_custom_call.1} parent=1 // loop_body
      %s22 = ssub.s32 %s17, 1
      %s23 = ssub.s32 %s17, 2
      %s30 = sadd.s32 1, %s25
      %p31 = scmp.ge.s32.totalorder %s30, 1
      %s32 = scalar_select %p31, 0, %s30
      %s33 = sadd.s32 1, %s24
      %s34 = scalar_select %p31, %s33, %s24
      %p35 = scmp.ge.s32.totalorder %s34, 2
      %s36 = scalar_select %p35, 0, %s34
      %s37 = ssub.s32 %s24, %s36
      %s38 = ssub.s32 %s25, %s32
      %s39 = sor.u32 %s37, %s38
      %p40 = scmp.eq.s32.totalorder %s39, 0
      %s42 = sadd.s32 %s41, 1
      %s43 = scalar_select %p40, %s41, %s42
      %p46 = pneg %p40
      %p47 = scmp.eq.s32.totalorder %s17, 1
      %p48 = por %p46, %p47
      %p49 = scmp.ne.s32.totalorder %s41, %s44
      %p50 = scmp.eq.s32.totalorder %s17, 0
      %p51 = por %p49, %p50
      %p52 = scmp.ne.s32.totalorder %s41, %s44
      %p53 = scmp.eq.s32.totalorder %s22, 1
      %p54 = por %p52, %p53
      %p55 = scmp.ne.s32.totalorder %s44, %s45
      %p56 = scmp.eq.s32.totalorder %s22, 0
      %p57 = por %p55, %p56
      %p58 = scmp.ne.s32.totalorder %s44, %s45
      %p59 = scmp.eq.s32.totalorder %s23, 1
      %p60 = por %p58, %p59
      %p62 = scmp.ne.s32.totalorder %s45, %s61
      %p63 = scmp.eq.s32.totalorder %s23, 0
      %p64 = por %p62, %p63
      %s65 = ssub.s32 %s25, %s32
      %p66 = scmp.eq.s32.totalorder %s65, 0
      %s68 = sadd.s32 %s67, 1
      %s69 = scalar_select %p66, %s67, %s68
      %p72 = pneg %p66
      %p73 = scmp.eq.s32.totalorder %s17, 1
      %p74 = por %p72, %p73
      %p75 = scmp.ne.s32.totalorder %s67, %s70
      %p76 = scmp.eq.s32.totalorder %s17, 0
      %p77 = por %p75, %p76
      %p78 = scmp.ne.s32.totalorder %s67, %s70
      %p79 = scmp.eq.s32.totalorder %s22, 1
      %p80 = por %p78, %p79
      %p81 = scmp.ne.s32.totalorder %s70, %s71
      %p82 = scmp.eq.s32.totalorder %s22, 0
      %p83 = por %p81, %p82
      %p84 = scmp.ne.s32.totalorder %s70, %s71
      %p85 = scmp.eq.s32.totalorder %s23, 1
      %p86 = por %p84, %p85
      %p88 = scmp.ne.s32.totalorder %s71, %s87
      %p89 = scmp.eq.s32.totalorder %s23, 0
      %p90 = por %p88, %p89
      %s92 = sadd.s32 %s91, 1
      %p95 = scmp.eq.s32.totalorder %s17, 1
      %p96 = scmp.ne.s32.totalorder %s91, %s93
      %p97 = scmp.eq.s32.totalorder %s17, 0
      %p98 = por %p96, %p97
      %p99 = scmp.ne.s32.totalorder %s91, %s93
      %p100 = scmp.eq.s32.totalorder %s22, 1
      %p101 = por %p99, %p100
      %p102 = scmp.ne.s32.totalorder %s93, %s94
      %p103 = scmp.eq.s32.totalorder %s22, 0
      %p104 = por %p102, %p103
      %p105 = scmp.ne.s32.totalorder %s93, %s94
      %p106 = scmp.eq.s32.totalorder %s23, 1
      %p107 = por %p105, %p106
      %p109 = scmp.ne.s32.totalorder %s94, %s108
      %p110 = scmp.eq.s32.totalorder %s23, 0
      %p111 = por %p109, %p110
      %s113 = sadd.s32 %s112, 1
      %p116 = scmp.eq.s32.totalorder %s17, 1
      %p117 = scmp.ne.s32.totalorder %s112, %s114
      %p118 = scmp.eq.s32.totalorder %s17, 0
      %p119 = por %p117, %p118
      %p120 = scmp.ne.s32.totalorder %s112, %s114
      %p121 = scmp.eq.s32.totalorder %s22, 1
      %p122 = por %p120, %p121
      %p123 = scmp.ne.s32.totalorder %s114, %s115
      %p124 = scmp.eq.s32.totalorder %s22, 0
      %p125 = por %p123, %p124
      %p126 = scmp.ne.s32.totalorder %s114, %s115
      %p127 = scmp.eq.s32.totalorder %s23, 1
      %p128 = por %p126, %p127
      %p130 = scmp.ne.s32.totalorder %s115, %s129
      %p131 = scmp.eq.s32.totalorder %s23, 0
      %p132 = por %p130, %p131
      %s133 = ssub.s32 %s24, %s36
      %p134 = scmp.eq.s32.totalorder %s133, 0
      %s136 = sadd.s32 %s135, 1
      %s137 = scalar_select %p134, %s135, %s136
      %p140 = pneg %p134
      %p141 = scmp.eq.s32.totalorder %s17, 1
      %p142 = por %p140, %p141
      %p143 = scmp.ne.s32.totalorder %s135, %s138
      %p144 = scmp.eq.s32.totalorder %s17, 0
      %p145 = por %p143, %p144
      %p146 = scmp.ne.s32.totalorder %s135, %s138
      %p147 = scmp.eq.s32.totalorder %s22, 1
      %p148 = por %p146, %p147
      %p149 = scmp.ne.s32.totalorder %s138, %s139
      %p150 = scmp.eq.s32.totalorder %s22, 0
      %p151 = por %p149, %p150
      %p152 = scmp.ne.s32.totalorder %s138, %s139
      %p153 = scmp.eq.s32.totalorder %s23, 1
      %p154 = por %p152, %p153
      %p156 = scmp.ne.s32.totalorder %s139, %s155
      %p157 = scmp.eq.s32.totalorder %s23, 0
      %p158 = por %p156, %p157
      %p159 = scmp.le.s32.totalorder 1, %s17
      %p160 = scmp.lt.s32.totalorder %s17, 3
      %p161 = pnand %p159, %p160
      %p162 = pneg %p161
      // Predicated region
      $region9: #{tpu_custom_call.1} parent=5 // pred_check
        _
      $region10: #{tpu_custom_call.1} parent=5 // pred_check_branch
        %164 = sbr.rel (%p161) target = $region12
      $region11: #{tpu_custom_call.1} parent=5 // pred_region
        %s165 = ssub.s32 %s17, 1
        // Predicated region
        $region13: #{tpu_custom_call.1} parent=11 // pred_check
          %p166 = pneg %p83
        $region14: #{tpu_custom_call.1} parent=11 // pred_check_branch
          %168 = sbr.rel (%p166) target = $region16
        $region15: #{tpu_custom_call.1} parent=11 // pred_region
          %s169 = smul.u32 16, %s27
          %171 = vsyncadd [#allocation7], 0
          %s172 = smul.addr %s169, 4
          %s173 = scalar_lea.hbm %s1, %s172
          %s174 = sshll.u32 %s173, 4
          %s175 = int_to_ptr.hbm [resolvable:$true] %s174
          %s176 = sshll.u32 [#allocation6], 4
          %s177 = int_to_ptr.vmem [resolvable:$true] %s176
          %182 = dma.hbm_to_vmem [thread:$0]  %s175, 1024, %s177, [#allocation7], 64, 64, 4
        $region16: #{tpu_custom_call.1} parent=11 // pred_fallthru
          _
        // Predicated region
        $region17: #{tpu_custom_call.1} parent=11 // pred_check
          %p183 = pneg %p104
        $region18: #{tpu_custom_call.1} parent=11 // pred_check_branch
          %185 = sbr.rel (%p183) target = $region20
        $region19: #{tpu_custom_call.1} parent=11 // pred_region
          _
        $region20: #{tpu_custom_call.1} parent=11 // pred_fallthru
          _
        // Predicated region
        $region21: #{tpu_custom_call.1} parent=11 // pred_check
          %p186 = pneg %p125
        $region22: #{tpu_custom_call.1} parent=11 // pred_check_branch
          %188 = sbr.rel (%p186) target = $region24
        $region23: #{tpu_custom_call.1} parent=11 // pred_region
          %190 = vsyncadd [#allocation7], 0
          %s191 = sshll.u32 %s3, 4
          %s192 = int_to_ptr.hbm [resolvable:$true] %s191
          %s193 = sshll.u32 [#allocation8], 4
          %s194 = int_to_ptr.vmem [resolvable:$true] %s193
          %199 = dma.hbm_to_vmem [thread:$0]  %s192, 1024, %s194, [#allocation7], 64, 64, 4
        $region24: #{tpu_custom_call.1} parent=11 // pred_fallthru
          _
      $region12: #{tpu_custom_call.1} parent=5 // pred_fallthru
        _
      %p200 = scmp.lt.s32.totalorder %s17, 2
      // Predicated region
      $region25: #{tpu_custom_call.1} parent=5 // pred_check
        %p201 = pneg %p200
      $region26: #{tpu_custom_call.1} parent=5 // pred_check_branch
        %203 = sbr.rel (%p201) target = $region28
      $region27: #{tpu_custom_call.1} parent=5 // pred_region
        // Predicated region
        $region29: #{tpu_custom_call.1} parent=27 // pred_check
          %p204 = pneg %p51
        $region30: #{tpu_custom_call.1} parent=27 // pred_check_branch
          %206 = sbr.rel (%p204) target = $region32
        $region31: #{tpu_custom_call.1} parent=27 // pred_region
          %s207 = sand.u32 %s41, 1
          %s208 = scalar_lea.sflag [#allocation4], %s207
          %s209 = sand.u32 %s41, 1
          %s210 = smul.addr %s209, 32
          %s211 = scalar_lea.vmem [#allocation3], %s210
          %s212 = smul.u32 8, %s24
          %214 = vsyncadd %s208, 0
          %s215 = sadd.s32 %s25, %s212
          %s216 = smul.addr %s215, 4
          %s217 = scalar_lea.hbm %s0, %s216
          %s218 = sshll.u32 %s217, 4
          %s219 = int_to_ptr.hbm [resolvable:$true] %s218
          %s220 = sshll.u32 %s211, 4
          %s221 = int_to_ptr.vmem [resolvable:$true] %s220
          %226 = dma.hbm_to_vmem [thread:$0]  %s219, 512, %s221, %s208, 64, 64, 4
        $region32: #{tpu_custom_call.1} parent=27 // pred_fallthru
          _
      $region28: #{tpu_custom_call.1} parent=5 // pred_fallthru
        _
      %p227 = scmp.le.s32.totalorder 1, %s17
      %p228 = scmp.lt.s32.totalorder %s17, 3
      %p229 = pnand %p227, %p228
      %p230 = pneg %p229
      // Predicated region
      $region33: #{tpu_custom_call.1} parent=5 // pred_check
        _
      $region34: #{tpu_custom_call.1} parent=5 // pred_check_branch
        %232 = sbr.rel (%p229) target = $region36
      $region35: #{tpu_custom_call.1} parent=5 // pred_region
        %s233 = ssub.s32 %s17, 1
        %s234 = sand.u32 %s44, 1
        %s235 = scalar_lea.sflag [#allocation4], %s234
        %s236 = sand.u32 %s44, 1
        %s237 = smul.addr %s236, 32
        %s238 = scalar_lea.vmem [#allocation3], %s237
        // Predicated region
        $region37: #{tpu_custom_call.1} parent=35 // pred_check
          %p239 = pneg %p57
        $region38: #{tpu_custom_call.1} parent=35 // pred_check_branch
          %241 = sbr.rel (%p239) target = $region40
        $region39: #{tpu_custom_call.1} parent=35 // pred_region
          %243 = dma.done %s235, 512
        $region40: #{tpu_custom_call.1} parent=35 // pred_fallthru
          _
        // Predicated region
        $region41: #{tpu_custom_call.1} parent=35 // pred_check
          %p244 = pneg %p83
        $region42: #{tpu_custom_call.1} parent=35 // pred_check_branch
          %246 = sbr.rel (%p244) target = $region44
        $region43: #{tpu_custom_call.1} parent=35 // pred_region
          %248 = dma.done [#allocation7], 1024
        $region44: #{tpu_custom_call.1} parent=35 // pred_fallthru
          _
        // Predicated region
        $region45: #{tpu_custom_call.1} parent=35 // pred_check
          %p249 = pneg %p125
        $region46: #{tpu_custom_call.1} parent=35 // pred_check_branch
          %251 = sbr.rel (%p249) target = $region48
        $region47: #{tpu_custom_call.1} parent=35 // pred_region
          %253 = dma.done [#allocation7], 1024
        $region48: #{tpu_custom_call.1} parent=35 // pred_fallthru
          _
        %s254 = sand.u32 %s44, 1
        %s255 = scalar_lea.sflag [#allocation4], %s254
        %s256 = sand.u32 %s44, 1
        %s257 = smul.addr %s256, 32
        %s258 = scalar_lea.vmem [#allocation3], %s257
        %p259 = pneg %p57
        %p260 = pneg %p54
        %p261 = pneg %p83
        %p262 = pneg %p80
        %p263 = pneg %p104
        %p264 = pneg %p101
        %p265 = pneg %p125
        %p266 = pneg %p122
        %p267 = pneg %p151
        %p268 = pneg %p148
        %s269 = sand.u32 %s138, 1
        %s270 = scalar_lea.sflag [#allocation5], %s269
        %s271 = sand.u32 %s138, 1
        %s272 = smul.addr %s271, 64
        %s273 = scalar_lea.vmem [#allocation9], %s272
        %s274 = smul.u32 8, %s26
        %s275 = smul.u32 16, %s27
        %s276 = smul.u32 8, %s26
        %p277 = scmp.eq.s32.totalorder %s27, 0
        // Predicated region
        $region49: #{tpu_custom_call.1} parent=35 // pred_check
          %p278 = pneg %p277
        $region50: #{tpu_custom_call.1} parent=35 // pred_check_branch
          %280 = sbr.rel (%p278) target = $region52
        $region51: #{tpu_custom_call.1} parent=35 // pred_region
          %281 = vst [vmem:[#allocation2] sm:$0xff] 0.0
          %282 = vst [vmem:[#allocation2 + $0x8] sm:$0xff] 0.0
          %283 = vst [vmem:[#allocation2 + $0x10] sm:$0xff] 0.0
          %284 = vst [vmem:[#allocation2 + $0x18] sm:$0xff] 0.0
          %285 = vst [vmem:[#allocation2 + $0x20] sm:$0xff] 0.0
          %286 = vst [vmem:[#allocation2 + $0x28] sm:$0xff] 0.0
          %287 = vst [vmem:[#allocation2 + $0x30] sm:$0xff] 0.0
          %288 = vst [vmem:[#allocation2 + $0x38] sm:$0xff] 0.0
        $region52: #{tpu_custom_call.1} parent=35 // pred_fallthru
          _
        %v289 = vld [vmem:[#allocation2] sm:$0xff]
        %v290 = vld [vmem:[#allocation2 + $0x8] sm:$0xff]
        %v291 = vld [vmem:[#allocation2 + $0x10] sm:$0xff]
        %v292 = vld [vmem:[#allocation2 + $0x18] sm:$0xff]
        %v293 = vld [vmem:[#allocation2 + $0x20] sm:$0xff]
        %v294 = vld [vmem:[#allocation2 + $0x28] sm:$0xff]
        %v295 = vld [vmem:[#allocation2 + $0x30] sm:$0xff]
        %v296 = vld [vmem:[#allocation2 + $0x38] sm:$0xff]
        %v297 = vld [vmem:[%s238] sm:$0xf]
        %v298 = vld [vmem:[%s238 + $0x4] sm:$0xf]
        %v299 = vld [vmem:[%s238 + $0x8] sm:$0xf]
        %v300 = vld [vmem:[%s238 + $0xc] sm:$0xf]
        %v301 = vld [vmem:[%s238 + $0x10] sm:$0xf]
        %v302 = vld [vmem:[%s238 + $0x14] sm:$0xf]
        %v303 = vld [vmem:[%s238 + $0x18] sm:$0xf]
        %v304 = vld [vmem:[%s238 + $0x1c] sm:$0xf]
        %v305 = vld [vmem:[#allocation6] sm:$0xf]
        %v306 = vld [vmem:[#allocation6 + $0x4] sm:$0xf]
        %v307 = vld [vmem:[#allocation6 + $0x8] sm:$0xf]
        %v308 = vld [vmem:[#allocation6 + $0xc] sm:$0xf]
        %v309 = vld [vmem:[#allocation6 + $0x10] sm:$0xf]
        %v310 = vld [vmem:[#allocation6 + $0x14] sm:$0xf]
        %v311 = vld [vmem:[#allocation6 + $0x18] sm:$0xf]
        %v312 = vld [vmem:[#allocation6 + $0x1c] sm:$0xf]
        %v313 = vld [vmem:[#allocation6 + $0x20] sm:$0xf]
        %v314 = vld [vmem:[#allocation6 + $0x24] sm:$0xf]
        %v315 = vld [vmem:[#allocation6 + $0x28] sm:$0xf]
        %v316 = vld [vmem:[#allocation6 + $0x2c] sm:$0xf]
        %v317 = vld [vmem:[#allocation6 + $0x30] sm:$0xf]
        %v318 = vld [vmem:[#allocation6 + $0x34] sm:$0xf]
        %v319 = vld [vmem:[#allocation6 + $0x38] sm:$0xf]
        %v320 = vld [vmem:[#allocation6 + $0x3c] sm:$0xf]
        %v329 = vunpack.c.l.b16 %v297
        %v330 = vunpack.c.l.b16 %v298
        %v331 = vunpack.c.l.b16 %v299
        %v332 = vunpack.c.l.b16 %v300
        %v333 = vunpack.c.l.b16 %v301
        %v334 = vunpack.c.l.b16 %v302
        %v335 = vunpack.c.l.b16 %v303
        %v336 = vunpack.c.l.b16 %v304
        %v337 = vpack.c.b16 %v330, %v329
        %v338 = vpack.c.b16 %v332, %v331
        %v339 = vpack.c.b16 %v334, %v333
        %v340 = vpack.c.b16 %v336, %v335
        %v361 = vunpack.c.l.b16 %v305
        %v362 = vunpack.c.l.b16 %v306
        %v363 = vunpack.c.l.b16 %v307
        %v364 = vunpack.c.l.b16 %v308
        %v365 = vunpack.c.l.b16 %v309
        %v366 = vunpack.c.l.b16 %v310
        %v367 = vunpack.c.l.b16 %v311
        %v368 = vunpack.c.l.b16 %v312
        %v369 = vunpack.c.l.b16 %v313
        %v370 = vunpack.c.l.b16 %v314
        %v371 = vunpack.c.l.b16 %v315
        %v372 = vunpack.c.l.b16 %v316
        %v373 = vunpack.c.l.b16 %v317
        %v374 = vunpack.c.l.b16 %v318
        %v375 = vunpack.c.l.b16 %v319
        %v376 = vunpack.c.l.b16 %v320
        %v377 = vpack.c.b16 %v362, %v361
        %v378 = vpack.c.b16 %v364, %v363
        %v379 = vpack.c.b16 %v366, %v365
        %v380 = vpack.c.b16 %v368, %v367
        %v381 = vpack.c.b16 %v370, %v369
        %v382 = vpack.c.b16 %v372, %v371
        %v383 = vpack.c.b16 %v374, %v373
        %v384 = vpack.c.b16 %v376, %v375
        %393 = vmatpush.bf16.msra.mxu0 %v384
        %394 = vmatpush.bf16.msra.mxu0 %v383
        %395 = vmatpush.bf16.msra.mxu0 %v382
        %396 = vmatpush.bf16.msra.mxu0 %v381
        %397 = vmatpush.bf16.msra.mxu0 %v380
        %398 = vmatpush.bf16.msra.mxu0 %v379
        %399 = vmatpush.bf16.msra.mxu0 %v378
        %400 = vmatpush.bf16.msra.mxu0 %v377
        %401 = vmatmul.bf16.gmra.mxu0 %v337
        %v402 = vpop.f32.mrf.mxu0
        %v403 = vadd.f32 0.0, %v402
        %v404 = vpop.f32.mrf.mxu0
        %v405 = vadd.f32 0.0, %v404
        %406 = vmatmul.bf16.gmra.mxu0 %v338
        %v407 = vpop.f32.mrf.mxu0
        %v408 = vadd.f32 0.0, %v407
        %v409 = vpop.f32.mrf.mxu0
        %v410 = vadd.f32 0.0, %v409
        %411 = vmatmul.bf16.gmra.mxu0 %v339
        %v412 = vpop.f32.mrf.mxu0
        %v413 = vadd.f32 0.0, %v412
        %v414 = vpop.f32.mrf.mxu0
        %v415 = vadd.f32 0.0, %v414
        %416 = vmatmul.bf16.gmra.mxu0 %v340
        %v417 = vpop.f32.mrf.mxu0
        %v418 = vadd.f32 0.0, %v417
        %v419 = vpop.f32.mrf.mxu0
        %v420 = vadd.f32 0.0, %v419
        %421 = vdwg.mxu0
        %v422 = vadd.f32 %v289, %v403
        %v423 = vadd.f32 %v290, %v405
        %v424 = vadd.f32 %v291, %v408
        %v425 = vadd.f32 %v292, %v410
        %v426 = vadd.f32 %v293, %v413
        %v427 = vadd.f32 %v294, %v415
        %v428 = vadd.f32 %v295, %v418
        %v429 = vadd.f32 %v296, %v420
        %430 = vst [vmem:[#allocation2] sm:$0xff] %v422
        %431 = vst [vmem:[#allocation2 + $0x8] sm:$0xff] %v423
        %432 = vst [vmem:[#allocation2 + $0x10] sm:$0xff] %v424
        %433 = vst [vmem:[#allocation2 + $0x18] sm:$0xff] %v425
        %434 = vst [vmem:[#allocation2 + $0x20] sm:$0xff] %v426
        %435 = vst [vmem:[#allocation2 + $0x28] sm:$0xff] %v427
        %436 = vst [vmem:[#allocation2 + $0x30] sm:$0xff] %v428
        %437 = vst [vmem:[#allocation2 + $0x38] sm:$0xff] %v429
        // Predicated region
        $region53: #{tpu_custom_call.1} parent=35 // pred_check
          %p438 = pneg %p277
        $region54: #{tpu_custom_call.1} parent=35 // pred_check_branch
          %440 = sbr.rel (%p438) target = $region56
        $region55: #{tpu_custom_call.1} parent=35 // pred_region
          %v441 = vld [vmem:[#allocation2] sm:$0xff]
          %v442 = vld [vmem:[#allocation2 + $0x8] sm:$0xff]
          %v443 = vld [vmem:[#allocation2 + $0x10] sm:$0xff]
          %v444 = vld [vmem:[#allocation2 + $0x18] sm:$0xff]
          %v445 = vld [vmem:[#allocation2 + $0x20] sm:$0xff]
          %v446 = vld [vmem:[#allocation2 + $0x28] sm:$0xff]
          %v447 = vld [vmem:[#allocation2 + $0x30] sm:$0xff]
          %v448 = vld [vmem:[#allocation2 + $0x38] sm:$0xff]
          %v449 = vld [vmem:[%s2] sm:$0x1]
          %v451 = vperm.slane %v449, 0
          %v453 = vadd.f32 %v441, %v451
          %v454 = vadd.f32 %v442, %v451
          %v455 = vadd.f32 %v443, %v451
          %v456 = vadd.f32 %v444, %v451
          %v457 = vadd.f32 %v445, %v451
          %v458 = vadd.f32 %v446, %v451
          %v459 = vadd.f32 %v447, %v451
          %v460 = vadd.f32 %v448, %v451
          %v461 = vmul.f32 %v453, %v453
          %v462 = vmul.f32 %v454, %v454
          %v463 = vmul.f32 %v455, %v455
          %v464 = vmul.f32 %v456, %v456
          %v465 = vmul.f32 %v457, %v457
          %v466 = vmul.f32 %v458, %v458
          %v467 = vmul.f32 %v459, %v459
          %v468 = vmul.f32 %v460, %v460
          %v469 = vpack.c.bf16 %v462, %v461
          %v470 = vpack.c.bf16 %v464, %v463
          %v471 = vpack.c.bf16 %v466, %v465
          %v472 = vpack.c.bf16 %v468, %v467
          %v473 = vld [vmem:[#allocation8] sm:$0xf]
          %v474 = vld [vmem:[#allocation8 + $0x4] sm:$0xf]
          %v475 = vld [vmem:[#allocation8 + $0x8] sm:$0xf]
          %v476 = vld [vmem:[#allocation8 + $0xc] sm:$0xf]
          %v477 = vld [vmem:[#allocation8 + $0x10] sm:$0xf]
          %v478 = vld [vmem:[#allocation8 + $0x14] sm:$0xf]
          %v479 = vld [vmem:[#allocation8 + $0x18] sm:$0xf]
          %v480 = vld [vmem:[#allocation8 + $0x1c] sm:$0xf]
          %v481 = vld [vmem:[#allocation8 + $0x20] sm:$0xf]
          %v482 = vld [vmem:[#allocation8 + $0x24] sm:$0xf]
          %v483 = vld [vmem:[#allocation8 + $0x28] sm:$0xf]
          %v484 = vld [vmem:[#allocation8 + $0x2c] sm:$0xf]
          %v485 = vld [vmem:[#allocation8 + $0x30] sm:$0xf]
          %v486 = vld [vmem:[#allocation8 + $0x34] sm:$0xf]
          %v487 = vld [vmem:[#allocation8 + $0x38] sm:$0xf]
          %v488 = vld [vmem:[#allocation8 + $0x3c] sm:$0xf]
          %v505 = vunpack.c.l.b16 %v473
          %v506 = vunpack.c.l.b16 %v474
          %v507 = vunpack.c.l.b16 %v475
          %v508 = vunpack.c.l.b16 %v476
          %v509 = vunpack.c.l.b16 %v477
          %v510 = vunpack.c.l.b16 %v478
          %v511 = vunpack.c.l.b16 %v479
          %v512 = vunpack.c.l.b16 %v480
          %v513 = vunpack.c.l.b16 %v481
          %v514 = vunpack.c.l.b16 %v482
          %v515 = vunpack.c.l.b16 %v483
          %v516 = vunpack.c.l.b16 %v484
          %v517 = vunpack.c.l.b16 %v485
          %v518 = vunpack.c.l.b16 %v486
          %v519 = vunpack.c.l.b16 %v487
          %v520 = vunpack.c.l.b16 %v488
          %v521 = vpack.c.b16 %v506, %v505
          %v522 = vpack.c.b16 %v508, %v507
          %v523 = vpack.c.b16 %v510, %v509
          %v524 = vpack.c.b16 %v512, %v511
          %v525 = vpack.c.b16 %v514, %v513
          %v526 = vpack.c.b16 %v516, %v515
          %v527 = vpack.c.b16 %v518, %v517
          %v528 = vpack.c.b16 %v520, %v519
          %537 = vmatpush.bf16.msra.mxu0 %v528
          %538 = vmatpush.bf16.msra.mxu0 %v527
          %539 = vmatpush.bf16.msra.mxu0 %v526
          %540 = vmatpush.bf16.msra.mxu0 %v525
          %541 = vmatpush.bf16.msra.mxu0 %v524
          %542 = vmatpush.bf16.msra.mxu0 %v523
          %543 = vmatpush.bf16.msra.mxu0 %v522
          %544 = vmatpush.bf16.msra.mxu0 %v521
          %545 = vmatmul.bf16.gmra.mxu0 %v469
          %v546 = vpop.f32.mrf.mxu0
          %v547 = vadd.f32 0.0, %v546
          %v548 = vpop.f32.mrf.mxu0
          %v549 = vadd.f32 0.0, %v548
          %550 = vmatmul.bf16.gmra.mxu0 %v470
          %v551 = vpop.f32.mrf.mxu0
          %v552 = vadd.f32 0.0, %v551
          %v553 = vpop.f32.mrf.mxu0
          %v554 = vadd.f32 0.0, %v553
          %555 = vmatmul.bf16.gmra.mxu0 %v471
          %v556 = vpop.f32.mrf.mxu0
          %v557 = vadd.f32 0.0, %v556
          %v558 = vpop.f32.mrf.mxu0
          %v559 = vadd.f32 0.0, %v558
          %560 = vmatmul.bf16.gmra.mxu0 %v472
          %v561 = vpop.f32.mrf.mxu0
          %v562 = vadd.f32 0.0, %v561
          %v563 = vpop.f32.mrf.mxu0
          %v564 = vadd.f32 0.0, %v563
          %565 = vdwg.mxu0
          %v566 = vrsqrt.pop %v547
          %v567 = vmul.f32 %v566, %v547
          %v568 = vmul.f32 %v567, %v566
          %v569 = vmul.f32 0.5, %v568
          %v570 = vsub.f32 1.5, %v569
          %v571 = vmul.f32 %v566, %v570
          %v572 = vmul.f32 %v547, %v571
          %vm573 = vcmp.eq.f32.partialorder %v547, inf
          %v574 = vsel %vm573, %v547, %v572
          %vm575 = vcmp.eq.f32.partialorder %v547, 0.0
          %v576 = vand.u32 %v547, 2147483648
          %v577 = vsel %vm575, %v576, %v574
          %v578 = vrsqrt.pop %v549
          %v579 = vmul.f32 %v578, %v549
          %v580 = vmul.f32 %v579, %v578
          %v581 = vmul.f32 0.5, %v580
          %v582 = vsub.f32 1.5, %v581
          %v583 = vmul.f32 %v578, %v582
          %v584 = vmul.f32 %v549, %v583
          %vm585 = vcmp.eq.f32.partialorder %v549, inf
          %v586 = vsel %vm585, %v549, %v584
          %vm587 = vcmp.eq.f32.partialorder %v549, 0.0
          %v588 = vand.u32 %v549, 2147483648
          %v589 = vsel %vm587, %v588, %v586
          %v590 = vrsqrt.pop %v552
          %v591 = vmul.f32 %v590, %v552
          %v592 = vmul.f32 %v591, %v590
          %v593 = vmul.f32 0.5, %v592
          %v594 = vsub.f32 1.5, %v593
          %v595 = vmul.f32 %v590, %v594
          %v596 = vmul.f32 %v552, %v595
          %vm597 = vcmp.eq.f32.partialorder %v552, inf
          %v598 = vsel %vm597, %v552, %v596
          %vm599 = vcmp.eq.f32.partialorder %v552, 0.0
          %v600 = vand.u32 %v552, 2147483648
          %v601 = vsel %vm599, %v600, %v598
          %v602 = vrsqrt.pop %v554
          %v603 = vmul.f32 %v602, %v554
          %v604 = vmul.f32 %v603, %v602
          %v605 = vmul.f32 0.5, %v604
          %v606 = vsub.f32 1.5, %v605
          %v607 = vmul.f32 %v602, %v606
          %v608 = vmul.f32 %v554, %v607
          %vm609 = vcmp.eq.f32.partialorder %v554, inf
          %v610 = vsel %vm609, %v554, %v608
          %vm611 = vcmp.eq.f32.partialorder %v554, 0.0
          %v612 = vand.u32 %v554, 2147483648
          %v613 = vsel %vm611, %v612, %v610
          %v614 = vrsqrt.pop %v557
          %v615 = vmul.f32 %v614, %v557
          %v616 = vmul.f32 %v615, %v614
          %v617 = vmul.f32 0.5, %v616
          %v618 = vsub.f32 1.5, %v617
          %v619 = vmul.f32 %v614, %v618
          %v620 = vmul.f32 %v557, %v619
          %vm621 = vcmp.eq.f32.partialorder %v557, inf
          %v622 = vsel %vm621, %v557, %v620
          %vm623 = vcmp.eq.f32.partialorder %v557, 0.0
          %v624 = vand.u32 %v557, 2147483648
          %v625 = vsel %vm623, %v624, %v622
          %v626 = vrsqrt.pop %v559
          %v627 = vmul.f32 %v626, %v559
          %v628 = vmul.f32 %v627, %v626
          %v629 = vmul.f32 0.5, %v628
          %v630 = vsub.f32 1.5, %v629
          %v631 = vmul.f32 %v626, %v630
          %v632 = vmul.f32 %v559, %v631
          %vm633 = vcmp.eq.f32.partialorder %v559, inf
          %v634 = vsel %vm633, %v559, %v632
          %vm635 = vcmp.eq.f32.partialorder %v559, 0.0
          %v636 = vand.u32 %v559, 2147483648
          %v637 = vsel %vm635, %v636, %v634
          %v638 = vrsqrt.pop %v562
          %v639 = vmul.f32 %v638, %v562
          %v640 = vmul.f32 %v639, %v638
          %v641 = vmul.f32 0.5, %v640
          %v642 = vsub.f32 1.5, %v641
          %v643 = vmul.f32 %v638, %v642
          %v644 = vmul.f32 %v562, %v643
          %vm645 = vcmp.eq.f32.partialorder %v562, inf
          %v646 = vsel %vm645, %v562, %v644
          %vm647 = vcmp.eq.f32.partialorder %v562, 0.0
          %v648 = vand.u32 %v562, 2147483648
          %v649 = vsel %vm647, %v648, %v646
          %v650 = vrsqrt.pop %v564
          %v651 = vmul.f32 %v650, %v564
          %v652 = vmul.f32 %v651, %v650
          %v653 = vmul.f32 0.5, %v652
          %v654 = vsub.f32 1.5, %v653
          %v655 = vmul.f32 %v650, %v654
          %v656 = vmul.f32 %v564, %v655
          %vm657 = vcmp.eq.f32.partialorder %v564, inf
          %v658 = vsel %vm657, %v564, %v656
          %vm659 = vcmp.eq.f32.partialorder %v564, 0.0
          %v660 = vand.u32 %v564, 2147483648
          %v661 = vsel %vm659, %v660, %v658
          %v662 = vadd.f32 %v547, 1.0
          %v663 = vadd.f32 %v549, 1.0
          %v664 = vadd.f32 %v552, 1.0
          %v665 = vadd.f32 %v554, 1.0
          %v666 = vadd.f32 %v557, 1.0
          %v667 = vadd.f32 %v559, 1.0
          %v668 = vadd.f32 %v562, 1.0
          %v669 = vadd.f32 %v564, 1.0
          %v670 = vadd.f32 %v577, 1e-08
          %v671 = vadd.f32 %v589, 1e-08
          %v672 = vadd.f32 %v601, 1e-08
          %v673 = vadd.f32 %v613, 1e-08
          %v674 = vadd.f32 %v625, 1e-08
          %v675 = vadd.f32 %v637, 1e-08
          %v676 = vadd.f32 %v649, 1e-08
          %v677 = vadd.f32 %v661, 1e-08
          %v678 = vmul.f32 %v662, %v670
          %v679 = vmul.f32 %v663, %v671
          %v680 = vmul.f32 %v664, %v672
          %v681 = vmul.f32 %v665, %v673
          %v682 = vmul.f32 %v666, %v674
          %v683 = vmul.f32 %v667, %v675
          %v684 = vmul.f32 %v668, %v676
          %v685 = vmul.f32 %v669, %v677
          %v686 = vrcp.pop %v678
          %v687 = vrcp.pop %v679
          %v688 = vrcp.pop %v680
          %v689 = vrcp.pop %v681
          %v690 = vrcp.pop %v682
          %v691 = vrcp.pop %v683
          %v692 = vrcp.pop %v684
          %v693 = vrcp.pop %v685
          %v694 = vmul.f32 %v547, %v686
          %v695 = vmul.f32 %v549, %v687
          %v696 = vmul.f32 %v552, %v688
          %v697 = vmul.f32 %v554, %v689
          %v698 = vmul.f32 %v557, %v690
          %v699 = vmul.f32 %v559, %v691
          %v700 = vmul.f32 %v562, %v692
          %v701 = vmul.f32 %v564, %v693
          %v702 = vmul.f32 %v453, %v694
          %v703 = vmul.f32 %v454, %v695
          %v704 = vmul.f32 %v455, %v696
          %v705 = vmul.f32 %v456, %v697
          %v706 = vmul.f32 %v457, %v698
          %v707 = vmul.f32 %v458, %v699
          %v708 = vmul.f32 %v459, %v700
          %v709 = vmul.f32 %v460, %v701
          %710 = vst [vmem:[%s273] sm:$0xff] %v702
          %711 = vst [vmem:[%s273 + $0x8] sm:$0xff] %v703
          %712 = vst [vmem:[%s273 + $0x10] sm:$0xff] %v704
          %713 = vst [vmem:[%s273 + $0x18] sm:$0xff] %v705
          %714 = vst [vmem:[%s273 + $0x20] sm:$0xff] %v706
          %715 = vst [vmem:[%s273 + $0x28] sm:$0xff] %v707
          %716 = vst [vmem:[%s273 + $0x30] sm:$0xff] %v708
          %717 = vst [vmem:[%s273 + $0x38] sm:$0xff] %v709
        $region56: #{tpu_custom_call.1} parent=35 // pred_fallthru
          _
        %s718 = sand.u32 %s138, 1
        %s719 = scalar_lea.sflag [#allocation5], %s718
        %s720 = sand.u32 %s138, 1
        %s721 = smul.addr %s720, 64
        %s722 = scalar_lea.vmem [#allocation9], %s721
        // Predicated region
        $region57: #{tpu_custom_call.1} parent=35 // pred_check
          %p723 = pneg %p148
        $region58: #{tpu_custom_call.1} parent=35 // pred_check_branch
          %725 = sbr.rel (%p723) target = $region60
        $region59: #{tpu_custom_call.1} parent=35 // pred_region
          %s726 = smul.u32 8, %s26
          %728 = vsyncadd %s719, 0
          %s729 = smul.addr %s726, 8
          %s730 = scalar_lea.hbm %s4, %s729
          %s731 = sshll.u32 %s722, 4
          %s732 = int_to_ptr.vmem [resolvable:$true] %s731
          %s733 = sshll.u32 %s730, 4
          %s734 = int_to_ptr.hbm [resolvable:$true] %s733
          %739 = dma.vmem_to_hbm [thread:$0]  %s732, 1024, %s734, %s719, 128, 128, 8
        $region60: #{tpu_custom_call.1} parent=35 // pred_fallthru
          _
      $region36: #{tpu_custom_call.1} parent=5 // pred_fallthru
        _
      %p740 = scmp.le.s32.totalorder 2, %s17
      // Predicated region
      $region61: #{tpu_custom_call.1} parent=5 // pred_check
        %p741 = pneg %p740
      $region62: #{tpu_custom_call.1} parent=5 // pred_check_branch
        %743 = sbr.rel (%p741) target = $region64
      $region63: #{tpu_custom_call.1} parent=5 // pred_region
        %s744 = ssub.s32 %s17, 2
        // Predicated region
        $region65: #{tpu_custom_call.1} parent=63 // pred_check
          %p745 = pneg %p154
        $region66: #{tpu_custom_call.1} parent=63 // pred_check_branch
          %747 = sbr.rel (%p745) target = $region68
        $region67: #{tpu_custom_call.1} parent=63 // pred_region
          %s748 = sand.u32 %s139, 1
          %s749 = scalar_lea.sflag [#allocation5], %s748
          %s750 = sand.u32 %s139, 1
          %s751 = smul.addr %s750, 64
          %s752 = scalar_lea.vmem [#allocation9], %s751
          %754 = dma.done %s749, 1024
        $region68: #{tpu_custom_call.1} parent=63 // pred_fallthru
          _
      $region64: #{tpu_custom_call.1} parent=5 // pred_fallthru
        _
    $region6: #{tpu_custom_call.1} parent=1 // loop_footer
      %s21 = sadd.s32 1, %s17
    $region7: #{tpu_custom_call.1} parent=1 // loop_footer_branch
      %16 = sbr.rel target = $region3
    $region8: #{tpu_custom_call.1} parent=1 // loop_exit
      _
    %755 = vsyncpa [#allocation4], 1
    %s756 = scalar_lea.sflag [#allocation4], 1
    %757 = vsyncpa %s756, 1
    %758 = vsyncpa [#allocation7], 1
    %759 = vsyncpa [#allocation5], 1
    %s760 = scalar_lea.sflag [#allocation5], 1
    %761 = vsyncpa %s760, 1

</llo_original>
